<compile_context>
chip_gen: v6e
topology: v6e:2x2x1
jax: 0.10.0
libtpu: 0.0.40
codegen_flags: <defaults>
</compile_context>

<pallas_src>
import functools

import jax
import jax.numpy as jnp
from jax import lax
from jax.experimental import pallas as pl
from jax.experimental.pallas import tpu as pltpu


def _round_up(x: int, m: int) -> int:
    return ((x + m - 1) // m) * m


def _multi_embedding_kernel(idx_ref, tab_ref, o_ref, *, c_pads):
    # idx_ref: (tm, V) int32                       -- one column of indices per variable
    # tab_ref: (K_total, D_total_pad) table dtype  -- block-diagonal packed tables (resident)
    # o_ref:   (tm, D_total_pad)                   -- concatenated embeddings, lane-dense
    tm, num_vars = idx_ref.shape
    k_total, _ = tab_ref.shape

    idx = idx_ref[...]                                              # (tm, V)
    col = lax.broadcasted_iota(jnp.int32, (tm, k_total), 1)         # category-slot iota

    # Build the multi-hot selector: variable j occupies K rows [off_j, off_j+c_pads[j]).
    # Exactly one hot per variable per row; column blocks in the table are disjoint,
    # so one matmul yields the concatenation of all V gathered rows (bit-exact in f32).
    mh = None
    off = 0
    for j in range(num_vars):                                       # V small & static
        hit = idx[:, j:j + 1] == (col - off)                        # (tm, K_total) bool
        mh = hit if mh is None else (mh | hit)
        off += c_pads[j]
    onehot = mh.astype(tab_ref.dtype)                               # exact in bf16/f32

    o_ref[...] = jnp.dot(onehot, tab_ref[...],
                         preferred_element_type=jnp.float32).astype(o_ref.dtype)


def pack_embedding_tables(tables, variable_names, dtype=jnp.float32):
    """Pack per-variable [C_j, D_j] tables ONCE (at setup, not per forward) into a
    block-diagonal [sum(round_up(C_j, 8)), round_up(sum(D_j), 128)] array.

    Returns (packed_table, c_pads, dims) where c_pads/dims are static tuples the
    kernel wrapper needs.  Pass dtype=jnp.bfloat16 to halve HBM traffic / feed the
    MXU bf16 (values are then bf16-rounded; keep f32 for bit-exact PyTorch parity).
    """
    c_pads = tuple(_round_up(int(tables[n].shape[0]), 8) for n in variable_names)
    dims = tuple(int(tables[n].shape[1]) for n in variable_names)
    d_total_pad = _round_up(sum(dims), 128)
    packed = jnp.zeros((sum(c_pads), d_total_pad), dtype)
    r = c = 0
    for j, name in enumerate(variable_names):
        t = jnp.asarray(tables[name], dtype)
        packed = packed.at[r:r + t.shape[0], c:c + t.shape[1]].set(t)
        r += c_pads[j]
        c += dims[j]
    return packed, c_pads, dims


@functools.partial(jax.jit, static_argnames=("c_pads", "dims", "tm"))
def multi_embedding_packed(x, packed_tables, *, c_pads, dims, tm=512):
    """x: int array [..., V]. Returns the concatenated embeddings [..., sum(D_j)]
    (the layout TFT consumes downstream anyway)."""
    v = len(c_pads)
    if x.shape[-1] != v:
        raise ValueError("last dim of x must equal the number of categorical variables")
    k_total, d_total_pad = packed_tables.shape
    tab_itemsize = jnp.dtype(packed_tables.dtype).itemsize

    lead = x.shape[:-1]
    idx2d = x.reshape(-1, v).astype(jnp.int32)
    n = idx2d.shape[0]

    # Large row tile (per-step overhead ~0.35us); shrink for tiny inputs instead
    # of padding 16 rows up to 512.
    tm_eff = min(tm, _round_up(n, 8))
    n_pad = _round_up(n, tm_eff)
    if n_pad != n:
        idx2d = jnp.pad(idx2d, ((0, n_pad - n), (0, 0)))

    out_dtype = packed_tables.dtype
    out_itemsize = jnp.dtype(out_dtype).itemsize

    # Explicit scoped-VMEM budget: 2x (idx tile + out tile) + 2x resident table
    # (constant index_map still double-buffers) + headroom.  Stays well inside
    # v7x's 64 MiB / v5e's defaults for any sane tm.
    vmem_need = (2 * (tm_eff * v * 4 + tm_eff * d_total_pad * out_itemsize)
                 + 2 * k_total * d_total_pad * tab_itemsize)
    vmem_limit = int(min(max(vmem_need + (8 << 20), 32 << 20), 100 << 20))

    # NOTE: if V * C is ever huge (high-cardinality vars), stream the table over a
    # V grid axis (table BlockSpec (1, c_pad, d_pad)) instead of keeping it resident.
    kernel = functools.partial(_multi_embedding_kernel, c_pads=c_pads)

    out = pl.pallas_call(
        kernel,
        out_shape=jax.ShapeDtypeStruct((n_pad, d_total_pad), out_dtype),
        grid_spec=pltpu.PrefetchScalarGridSpec(
            num_scalar_prefetch=0,
            grid=(n_pad // tm_eff,),
            in_specs=[
                pl.BlockSpec((tm_eff, v), lambda i: (i, 0)),               # row tile of indices
                pl.BlockSpec((k_total, d_total_pad), lambda i: (0, 0)),    # block-diag tables, resident
            ],
            out_specs=pl.BlockSpec((tm_eff, d_total_pad), lambda i: (i, 0)),
        ),
        compiler_params=pltpu.CompilerParams(
            dimension_semantics=("parallel",),
            vmem_limit_bytes=vmem_limit,
        ),
        cost_estimate=pl.CostEstimate(
            flops=2 * n_pad * k_total * d_total_pad,
            transcendentals=0,
            bytes_accessed=(idx2d.size * 4
                            + k_total * d_total_pad * tab_itemsize
                            + n_pad * d_total_pad * out_itemsize),
        ),
    )(idx2d, packed_tables)

    d_total = sum(dims)
    return out[:n, :d_total].reshape(*lead, d_total)


def multi_embedding(x, packed_tables, *, variable_names, c_pads, dims, tm=512):
    """Matches the PyTorch module forward: {name: [..., D_name]}.
    The split is cheap contiguous last-dim slicing of the single concatenated slab."""
    packed = multi_embedding_packed(x, packed_tables,
                                    c_pads=tuple(c_pads), dims=tuple(dims), tm=tm)
    result, off = {}, 0
    for j, name in enumerate(variable_names):
        result[name] = packed[..., off:off + dims[j]]
        off += dims[j]
    return result


def multi_embedding_reference(x, tables, variable_names):
    """Plain-JAX reference of the PyTorch forward."""
    return {name: tables[name][x[..., j]] for j, name in enumerate(variable_names)}


if __name__ == "__main__":
    key = jax.random.PRNGKey(0)

    # Small shapes consistent with the module: batch x time x categoricals.
    embedding_sizes = {"cat1": (10, 3), "cat2": (7, 4), "cat3": (20, 5)}
    variable_names = ("cat1", "cat2", "cat3")
    batch, seq = 2, 8

    keys = jax.random.split(key, len(variable_names) + 1)
    # nn.Embedding default init ~ N(0, 1)
    tables = {
        name: jax.random.normal(keys[j], embedding_sizes[name], jnp.float32)
        for j, name in enumerate(variable_names)
    }
    x = jnp.stack(
        [
            jax.random.randint(
                jax.random.fold_in(keys[-1], j), (batch, seq), 0, embedding_sizes[name][0]
            )
            for j, name in enumerate(variable_names)
        ],
        axis=-1,
    )  # [batch, seq, V] int32

    # Note: out-of-range indices produce zero/garbage rows (undefined in torch too).
    packed, c_pads, dims = pack_embedding_tables(tables, variable_names, dtype=jnp.float32)

    out = multi_embedding(
        x, packed, variable_names=variable_names, c_pads=c_pads, dims=dims, tm=512
    )
    out = jax.block_until_ready(out)

    ref = multi_embedding_reference(x, tables, variable_names)
    for j, name in enumerate(variable_names):
        assert out[name].shape == (batch, seq, embedding_sizes[name][1])
        assert jnp.allclose(out[name], ref[name], atol=1e-6, rtol=1e-6), f"mismatch: {name}"

    print("KERNEL_OK")
</pallas_src>

<mosaic_0001>
module attributes {stable_mosaic.version = 11 : i64} {
  func.func @_multi_embedding_kernel(%arg0: i32, %arg1: memref<16x3xi32, #tpu.memory_space<vmem>>, %arg2: memref<48x128xf32, #tpu.memory_space<vmem>>, %arg3: memref<16x128xf32, #tpu.memory_space<vmem>>) attributes {dimension_semantics = [#tpu.dimension_semantics<parallel>], iteration_bounds = array<i64: 1>, scalar_prefetch = 0 : i64, scratch_operands = 0 : i64, tpu.core_type = #tpu.core_type<tc>, window_params = [{transform_indices = @transform_0, window_bounds = array<i64: 16, 3>}, {pipeline_mode = #tpu.pipeline_mode<synchronous>, transform_indices = @transform_1, window_bounds = array<i64: 48, 128>}, {transform_indices = @transform_2, window_bounds = array<i64: 16, 128>}]} {
    %c0 = arith.constant 0 : index
    %c0_0 = arith.constant 0 : index
    %0 = vector.load %arg1[%c0, %c0_0] : memref<16x3xi32, #tpu.memory_space<vmem>>, vector<16x3xi32>
    %1 = tpu.iota {dimensions = array<i32: 1>} : vector<16x48xi32>
    %2 = vector.extract_strided_slice %0 {offsets = [0, 0], sizes = [16, 1], strides = [1, 1]} : vector<16x3xi32> to vector<16x1xi32>
    %c0_i32 = arith.constant 0 : i32
    %3 = vector.broadcast %c0_i32 : i32 to vector<16x48xi32>
    %4 = arith.subi %1, %3 : vector<16x48xi32>
    %5 = vector.broadcast %2 : vector<16x1xi32> to vector<16x48xi32>
    %6 = arith.cmpi eq, %5, %4 : vector<16x48xi32>
    %7 = vector.extract_strided_slice %0 {offsets = [0, 1], sizes = [16, 1], strides = [1, 1]} : vector<16x3xi32> to vector<16x1xi32>
    %c16_i32 = arith.constant 16 : i32
    %8 = vector.broadcast %c16_i32 : i32 to vector<16x48xi32>
    %9 = arith.subi %1, %8 : vector<16x48xi32>
    %10 = vector.broadcast %7 : vector<16x1xi32> to vector<16x48xi32>
    %11 = arith.cmpi eq, %10, %9 : vector<16x48xi32>
    %12 = arith.ori %6, %11 : vector<16x48xi1>
    %13 = vector.extract_strided_slice %0 {offsets = [0, 2], sizes = [16, 1], strides = [1, 1]} : vector<16x3xi32> to vector<16x1xi32>
    %c24_i32 = arith.constant 24 : i32
    %14 = vector.broadcast %c24_i32 : i32 to vector<16x48xi32>
    %15 = arith.subi %1, %14 : vector<16x48xi32>
    %16 = vector.broadcast %13 : vector<16x1xi32> to vector<16x48xi32>
    %17 = arith.cmpi eq, %16, %15 : vector<16x48xi32>
    %18 = arith.ori %12, %17 : vector<16x48xi1>
    %19 = arith.extui %18 : vector<16x48xi1> to vector<16x48xi32>
    %20 = arith.sitofp %19 : vector<16x48xi32> to vector<16x48xf32>
    %c0_1 = arith.constant 0 : index
    %c0_2 = arith.constant 0 : index
    %21 = vector.load %arg2[%c0_1, %c0_2] : memref<48x128xf32, #tpu.memory_space<vmem>>, vector<48x128xf32>
    %cst = arith.constant dense<0.000000e+00> : vector<16x128xf32>
    %22 = tpu.matmul %20, %21, %cst {dimension_numbers = #tpu.dot_dimension_numbers<[1], [0], [0], [1], [0, 0, 1, 1], [], []>} : vector<16x48xf32>, vector<48x128xf32>, vector<16x128xf32> -> vector<16x128xf32>
    %c0_3 = arith.constant 0 : index
    %c0_4 = arith.constant 0 : index
    %23 = vector.load %arg3[%c0_3, %c0_4] : memref<16x128xf32, #tpu.memory_space<vmem>>, vector<16x128xf32>
    tpu.vector_store %arg3[%c0_3, %c0_4], %22 {strides = array<i32>} : memref<16x128xf32, #tpu.memory_space<vmem>>, vector<16x128xf32>,
    return
  }
  func.func @transform_0(%arg0: i32) -> (i32, i32) {
    %c0_i32 = arith.constant 0 : i32
    %c0_i32_0 = arith.constant 0 : i32
    return %arg0, %c0_i32 : i32, i32
  }
  func.func @transform_1(%arg0: i32) -> (i32, i32) {
    %c0_i32 = arith.constant 0 : i32
    %c0_i32_0 = arith.constant 0 : i32
    %c0_i32_1 = arith.constant 0 : i32
    return %c0_i32, %c0_i32_0 : i32, i32
  }
  func.func @transform_2(%arg0: i32) -> (i32, i32) {
    %c0_i32 = arith.constant 0 : i32
    %c0_i32_0 = arith.constant 0 : i32
    return %arg0, %c0_i32 : i32, i32
  }
}

</mosaic_0001>

<llo_original>
// kernel: multi_embedding_packed.1
$region0: #{multi_embedding_packed.1}
  #allocation0 [shape = 'u32[]', space=smem, size = 0x4, offset = 0x4, fixed_abs, tag = 'smem constant byte address 0x4 - core index']
  #allocation1 [shape = 'u32[144,128]{1,0:T(1,128)}', space=vmem, size = 0x12000, scoped, tag = 'internal scratch']
  %s0 = inlined_call_operand.vmem [shape: s32[16,3], index: 0, kind: input, shape index: {}]
  %s1 = inlined_call_operand.hbm [shape: f32[48,128], index: 1, kind: input, shape index: {}]
  %s2 = inlined_call_operand.vmem [shape: f32[16,128], index: 2, kind: output, shape index: {}]
  %s3 = sld [smem:[#allocation0]]
  $region22: #{multi_embedding_packed.1} parent=0
    _
  %s5 = ssub.s32 1, %s3
  %s6 = scalar_select 0, %s5, %s3
  $region1: #{multi_embedding_packed.1} parent=0
    #allocation2 [shape = 'u8[24576]{0}', space=vmem, size = 0x6000, scoped, tag = 'input window, operand 1, single buffered']
    #allocation3 [shape = 's32[1]{0}', space=sflag, size = 0x4, scoped, tag = 'scoped memory for multi_embedding_packed.1']
    %7 = vsyncpa [#allocation3], 0
    // Predicated region
    $region2: #{multi_embedding_packed.1} parent=1 // pred_check
      _
    $region3: #{multi_embedding_packed.1} parent=1 // pred_check_branch
      %9 = sbr.rel (0) target = $region5
    $region4: #{multi_embedding_packed.1} parent=1 // pred_region
      _
    $region5: #{multi_embedding_packed.1} parent=1 // pred_fallthru
      _
    // Predicated region
    $region6: #{multi_embedding_packed.1} parent=1 // pred_check
      _
    $region7: #{multi_embedding_packed.1} parent=1 // pred_check_branch
      %11 = sbr.rel (0) target = $region9
    $region8: #{multi_embedding_packed.1} parent=1 // pred_region
      %s13 = ssub.s32 768, 768
      %14 = vsyncadd [#allocation3], %s13
      %s15 = sshll.u32 [#allocation2], 4
      %s16 = int_to_ptr.vmem [resolvable:$true] %s15
      %21 = dma.hbm_to_vmem [thread:$0]  %s1, 768, %s16, [#allocation3], 128, 128, 8
    $region9: #{multi_embedding_packed.1} parent=1 // pred_fallthru
      _
    // Predicated region
    $region10: #{multi_embedding_packed.1} parent=1 // pred_check
      _
    $region11: #{multi_embedding_packed.1} parent=1 // pred_check_branch
      %23 = sbr.rel (0) target = $region13
    $region12: #{multi_embedding_packed.1} parent=1 // pred_region
      %24 = dma.done [#allocation3], 768
    $region13: #{multi_embedding_packed.1} parent=1 // pred_fallthru
      _
    %v25 = vld [vmem:[%s0] sm:$0xff]
    %v26 = vld [vmem:[%s0 + $0x8] sm:$0xff]
    %v27 = vlaneseq
    %v28 = vand.u32 %v27, 127
    %29 = vset.pattern.permute.xlu0 0
    %30 = vperm.xlu0 %29, %v25
    %v31 = vpop.permute.xlu0 %30
    %32 = vset.pattern.permute.xlu0 0
    %33 = vperm.xlu0 %32, %v26
    %v34 = vpop.permute.xlu0 %33
    %vm35 = vcmp.eq.s32.totalorder %v31, %v28
    %vm36 = vcmp.eq.s32.totalorder %v34, %v28
    %v37 = vsub.s32 %v28, 16
    %38 = vset.pattern.permute.xlu0 1
    %39 = vperm.xlu0 %38, %v25
    %v40 = vpop.permute.xlu0 %39
    %41 = vset.pattern.permute.xlu0 1
    %42 = vperm.xlu0 %41, %v26
    %v43 = vpop.permute.xlu0 %42
    %vm44 = vcmp.eq.s32.totalorder %v40, %v37
    %vm45 = vcmp.eq.s32.totalorder %v43, %v37
    %vm46 = vmor %vm35, %vm44
    %vm47 = vmor %vm36, %vm45
    %v48 = vsub.s32 %v28, 24
    %49 = vset.pattern.permute.xlu0 2
    %50 = vperm.xlu0 %49, %v25
    %v51 = vpop.permute.xlu0 %50
    %52 = vset.pattern.permute.xlu0 2
    %53 = vperm.xlu0 %52, %v26
    %v54 = vpop.permute.xlu0 %53
    %vm55 = vcmp.eq.s32.totalorder %v51, %v48
    %vm56 = vcmp.eq.s32.totalorder %v54, %v48
    %vm57 = vmor %vm46, %vm55
    %vm58 = vmor %vm47, %vm56
    %v59 = vsel %vm57, 1, 0
    %v60 = vsel %vm58, 1, 0
    %v61 = vcvt.s32.f32 %v59
    %v62 = vcvt.s32.f32 %v60
    %v63 = vld [vmem:[#allocation2] sm:$0xff]
    %v64 = vld [vmem:[#allocation2 + $0x8] sm:$0xff]
    %v65 = vld [vmem:[#allocation2 + $0x10] sm:$0xff]
    %v66 = vld [vmem:[#allocation2 + $0x18] sm:$0xff]
    %v67 = vld [vmem:[#allocation2 + $0x20] sm:$0xff]
    %v68 = vld [vmem:[#allocation2 + $0x28] sm:$0xff]
    %vm69 = vcmask 392192
    %v71 = vsel %vm69, %v61, 0
    %v74 = vsel %vm69, %v62, 0
    %76 = vmatprep.subr.mxu0 0.0
    %77 = vmatpush1.msra.mxu0 0.0
    %78 = vmatprep.subr.mxu0 0.0
    %79 = vmatpush1.msra.mxu0 0.0
    %80 = vmatprep.subr.mxu0 0.0
    %81 = vmatpush1.msra.mxu0 0.0
    %82 = vmatprep.subr.mxu0 0.0
    %83 = vmatpush1.msra.mxu0 0.0
    %84 = vmatprep.subr.mxu0 0.0
    %85 = vmatpush1.msra.mxu0 0.0
    %86 = vmatprep.subr.mxu0 0.0
    %87 = vmatpush1.msra.mxu0 0.0
    %88 = vmatprep.subr.mxu0 0.0
    %89 = vmatpush1.msra.mxu0 0.0
    %90 = vmatprep.subr.mxu0 0.0
    %91 = vmatpush1.msra.mxu0 0.0
    %92 = vmatprep.subr.mxu0 0.0
    %93 = vmatpush1.msra.mxu0 0.0
    %94 = vmatprep.subr.mxu0 0.0
    %95 = vmatpush1.msra.mxu0 0.0
    %96 = vmatprep.subr.mxu0 0.0
    %97 = vmatpush1.msra.mxu0 %v68
    %98 = vmatprep.subr.mxu0 0.0
    %99 = vmatpush1.msra.mxu0 %v67
    %100 = vmatprep.subr.mxu0 0.0
    %101 = vmatpush1.msra.mxu0 %v66
    %102 = vmatprep.subr.mxu0 0.0
    %103 = vmatpush1.msra.mxu0 %v65
    %104 = vmatprep.subr.mxu0 0.0
    %105 = vmatpush1.msra.mxu0 %v64
    %106 = vmatprep.subr.mxu0 0.0
    %107 = vmatpush1.msra.mxu0 %v63
    %108 = vmatprep.subr.mxu0 0.0
    %109 = vmatpush2.msra.mxu0 0.0
    %110 = vmatprep.subr.mxu0 0.0
    %111 = vmatpush2.msra.mxu0 0.0
    %112 = vmatprep.subr.mxu0 0.0
    %113 = vmatpush2.msra.mxu0 0.0
    %114 = vmatprep.subr.mxu0 0.0
    %115 = vmatpush2.msra.mxu0 0.0
    %116 = vmatprep.subr.mxu0 0.0
    %117 = vmatpush2.msra.mxu0 0.0
    %118 = vmatprep.subr.mxu0 0.0
    %119 = vmatpush2.msra.mxu0 0.0
    %120 = vmatprep.subr.mxu0 0.0
    %121 = vmatpush2.msra.mxu0 0.0
    %122 = vmatprep.subr.mxu0 0.0
    %123 = vmatpush2.msra.mxu0 0.0
    %124 = vmatprep.subr.mxu0 0.0
    %125 = vmatpush2.msra.mxu0 0.0
    %126 = vmatprep.subr.mxu0 0.0
    %127 = vmatpush2.msra.mxu0 0.0
    %128 = vmatprep.subr.mxu0 0.0
    %129 = vmatpush2.msra.mxu0 0.0
    %130 = vmatprep.subr.mxu0 0.0
    %131 = vmatpush2.msra.mxu0 0.0
    %132 = vmatprep.subr.mxu0 0.0
    %133 = vmatpush2.msra.mxu0 0.0
    %134 = vmatprep.subr.mxu0 0.0
    %135 = vmatpush2.msra.mxu0 0.0
    %136 = vmatprep.subr.mxu0 0.0
    %137 = vmatpush2.msra.mxu0 0.0
    %138 = vmatprep.subr.mxu0 0.0
    %139 = vmatpush2.msra.mxu0 0.0
    %140 = vmatprep.mubr.f32.mxu0 0.0
    %141 = vmatmul.mubr.f32.gmra.mxu0 %v71
    %v142 = vpop.f32.mrf.mxu0
    %v143 = vadd.f32 0.0, %v142
    %v144 = vpop.f32.mrf.mxu0
    %145 = vmatprep.mubr.f32.mxu0 0.0
    %146 = vmatmul.mubr.f32.gmra.mxu0 %v74
    %v147 = vpop.f32.mrf.mxu0
    %v148 = vadd.f32 0.0, %v147
    %v149 = vpop.f32.mrf.mxu0
    %150 = vdwg.mxu0
    %151 = vst [vmem:[%s2] sm:$0xff] %v143
    %152 = vst [vmem:[%s2 + $0x8] sm:$0xff] %v148
    // Predicated region
    $region14: #{multi_embedding_packed.1} parent=1 // pred_check
      _
    $region15: #{multi_embedding_packed.1} parent=1 // pred_check_branch
      %154 = sbr.rel (0) target = $region17
    $region16: #{multi_embedding_packed.1} parent=1 // pred_region
      _
    $region17: #{multi_embedding_packed.1} parent=1 // pred_fallthru
      _
    // Predicated region
    $region18: #{multi_embedding_packed.1} parent=1 // pred_check
      _
    $region19: #{multi_embedding_packed.1} parent=1 // pred_check_branch
      %156 = sbr.rel (0) target = $region21
    $region20: #{multi_embedding_packed.1} parent=1 // pred_region
      _
    $region21: #{multi_embedding_packed.1} parent=1 // pred_fallthru
      _
    %157 = vsyncpa [#allocation3], 1

</llo_original>
